<compile_context>
chip_gen: v7x
topology: tpu7x:2x2x1
jax: 0.10.0
libtpu: 0.0.40
codegen_flags: <defaults>
</compile_context>

<pallas_src>
import functools

import jax
import jax.numpy as jnp
from jax import lax
from jax.experimental import pallas as pl
from jax.experimental.pallas import tpu as pltpu


def _wbce_kernel(x_ref, y_ref, out_ref, *,
                 actual_b, tile_b, needs_mask, accumulate):
    """One batch tile per grid step -> lane-dense (8, c_pad) partial sums."""
    i = pl.program_id(0)

    x = x_ref[...]                                  # (tile_b, c_pad) logits
    y = y_ref[...]                                  # (tile_b, c_pad) targets
    if x.dtype != jnp.float32:
        x = x.astype(jnp.float32)
    if y.dtype != jnp.float32:
        y = y.astype(jnp.float32)

    # Numerically-stable BCEWithLogits (same formula PyTorch uses):
    #   loss = max(x, 0) - x*y + log1p(exp(-|x|))
    loss = jnp.maximum(x, 0.0) - x * y + jnp.log1p(jnp.exp(-jnp.abs(x)))
    c = loss.shape[-1]

    def reduce8(v):
        # Batch reduce in groups of 8 sublanes: pure VPU vreg adds, no XLU.
        return jnp.sum(v.reshape(tile_b // 8, 8, c), axis=0)

    def masked_reduce8():
        # Select (not multiply) so NaN/garbage in the padded rows cannot leak.
        rows = lax.broadcasted_iota(jnp.int32, (tile_b, 1), 0) + i * tile_b
        return reduce8(jnp.where(rows < actual_b, loss, 0.0))

    if accumulate:
        # Resident accumulator output block (out index_map is constant).
        @pl.when(i == 0)
        def _():
            out_ref[...] = jnp.zeros_like(out_ref)

        if not needs_mask:
            out_ref[...] += reduce8(loss)
        else:
            last = pl.num_programs(0) - 1

            @pl.when(i != last)
            def _():
                out_ref[...] += reduce8(loss)

            @pl.when(i == last)
            def _():
                out_ref[...] += masked_reduce8()
    else:
        # Each grid step owns its own (8, c_pad) output block.
        out_ref[...] = reduce8(loss)
        if needs_mask:
            # Only the last (ragged) tile pays the mask cost; it overwrites the
            # unmasked write above.
            @pl.when(i == pl.num_programs(0) - 1)
            def _():
                out_ref[...] = masked_reduce8()


def weighted_bce_with_logits_loss(logits, targets, weights, *,
                                  tile_b=None,
                                  vmem_limit_bytes=None):
    """sum(BCEWithLogits(logits, targets) * weights) / sum(weights).

    logits, targets: (B, C) float32/bfloat16; weights: (C,), broadcast over batch.
    Matches the PyTorch module: divide by sum(weights) only (not B*sum(weights)).
    """
    B, C = logits.shape
    assert targets.shape == (B, C)
    weights = weights.astype(jnp.float32).reshape(C)

    # Zero-pad C to a lane multiple: keeps the in-kernel reshape a no-copy view
    # and the output stores unmasked. Padded columns are sliced off before
    # weighting, so they never contribute.
    c_pad = ((C + 127) // 128) * 128
    if c_pad != C:
        pad = ((0, 0), (0, c_pad - C))
        logits = jnp.pad(logits, pad)
        targets = jnp.pad(targets, pad)

    elem_bytes = max(jnp.dtype(logits.dtype).itemsize,
                     jnp.dtype(targets.dtype).itemsize)

    if tile_b is None:
        # ~4 MiB per input block using the lane-padded class dim and the real
        # input dtype: 2 inputs x 2 pipeline buffers ~= 16 MiB, safe on every
        # generation (v7x included: 64 MiB physical / 32 MiB scoped VMEM).
        target_bytes = 4 * 1024 * 1024
        tile_b = max(8, (target_bytes // (elem_bytes * c_pad)) // 8 * 8)
    tile_b = min(tile_b, ((B + 7) // 8) * 8)        # don't exceed (padded) batch
    tile_b = max(8, (tile_b // 8) * 8)              # keep sublane-aligned

    # Clamp per-block bytes so a tile tuned on v5e/v6e can't blow v7x's VMEM:
    # <= ~10 MiB/block -> 2 inputs x 2 buffers <= ~40 MiB pipeline footprint.
    max_block_bytes = 10 * 1024 * 1024
    max_tile_b = max(8, (max_block_bytes // (elem_bytes * c_pad)) // 8 * 8)
    tile_b = min(tile_b, max_tile_b)

    grid_b = pl.cdiv(B, tile_b)
    needs_mask = (B % tile_b) != 0

    # When large C forces a small tile_b, per-step (8, c_pad) writeback (plus
    # the JAX-side re-read) adds ~(8/tile_b) of one input's HBM bytes; switch
    # to a resident accumulator output so writeback doesn't scale with grid_b.
    accumulate = (grid_b > 1) and (tile_b <= 128)

    block_bytes = tile_b * c_pad * elem_bytes
    if vmem_limit_bytes is None:
        need = 2 * 2 * block_bytes + 2 * 8 * c_pad * 4 + (2 << 20)
        vmem_limit_bytes = int(min(max(need, 32 << 20), 48 << 20))

    kernel = functools.partial(_wbce_kernel,
                               actual_b=B, tile_b=tile_b,
                               needs_mask=needs_mask, accumulate=accumulate)

    if accumulate:
        out_rows = 8
        out_spec = pl.BlockSpec((8, c_pad), lambda i: (0, 0))
        semantics = ("arbitrary",)      # output block carried across the axis
    else:
        out_rows = grid_b * 8
        out_spec = pl.BlockSpec((8, c_pad), lambda i: (i, 0))
        semantics = ("parallel",)       # no carried state across the grid

    partials = pl.pallas_call(
        kernel,
        out_shape=jax.ShapeDtypeStruct((out_rows, c_pad), jnp.float32),
        grid_spec=pltpu.PrefetchScalarGridSpec(
            num_scalar_prefetch=0,
            grid=(grid_b,),
            in_specs=[
                pl.BlockSpec((tile_b, c_pad), lambda i: (i, 0)),   # logits tile
                pl.BlockSpec((tile_b, c_pad), lambda i: (i, 0)),   # targets tile
            ],
            out_specs=out_spec,
        ),
        compiler_params=pltpu.CompilerParams(
            dimension_semantics=semantics,
            vmem_limit_bytes=vmem_limit_bytes,
        ),
    )(logits, targets)

    # Tiny final reduce: per-class sums, then apply weights (exact rewrite of
    # the per-element multiply) and normalize by sum(weights).
    per_class = jnp.sum(partials, axis=0)[:C]       # (C,)
    return jnp.sum(per_class * weights) / jnp.sum(weights)


def _reference(logits, targets, weights):
    x = logits.astype(jnp.float32)
    y = targets.astype(jnp.float32)
    loss = jnp.maximum(x, 0.0) - x * y + jnp.log1p(jnp.exp(-jnp.abs(x)))
    w = weights.astype(jnp.float32).reshape(1, -1)
    return jnp.sum(loss * w) / jnp.sum(w)


if __name__ == "__main__":
    key = jax.random.PRNGKey(0)
    k1, k2, k3, k4, k5, k6, k7, k8 = jax.random.split(key, 8)

    # 1) TPU-tile-aligned, single-tile (partial-output "parallel" path).
    B, C = 8, 128
    logits = jax.random.normal(k1, (B, C), dtype=jnp.float32)
    targets = jax.random.bernoulli(k2, p=0.3, shape=(B, C)).astype(jnp.float32)
    weights = jax.random.uniform(k3, (C,), dtype=jnp.float32, minval=0.5, maxval=2.0)
    out = jax.block_until_ready(weighted_bce_with_logits_loss(logits, targets, weights))
    ref = _reference(logits, targets, weights)
    assert jnp.allclose(out, ref, rtol=1e-5, atol=1e-5), (out, ref)

    # 2) Multi-tile with ragged last tile (accumulator path + gated mask).
    B2 = 24
    logits2 = jax.random.normal(k4, (B2, C), dtype=jnp.float32)
    targets2 = jax.random.bernoulli(k5, p=0.5, shape=(B2, C)).astype(jnp.float32)
    out2 = jax.block_until_ready(
        weighted_bce_with_logits_loss(logits2, targets2, weights, tile_b=16))
    ref2 = _reference(logits2, targets2, weights)
    assert jnp.allclose(out2, ref2, rtol=1e-5, atol=1e-5), (out2, ref2)

    # 3) Non-128-multiple C, bf16 inputs, ragged batch (pad path + dtype path).
    B3, C3 = 20, 100
    logits3 = jax.random.normal(k6, (B3, C3), dtype=jnp.bfloat16)
    targets3 = jax.random.bernoulli(k7, p=0.4, shape=(B3, C3)).astype(jnp.bfloat16)
    weights3 = jax.random.uniform(k8, (C3,), dtype=jnp.float32, minval=0.5, maxval=2.0)
    out3 = jax.block_until_ready(
        weighted_bce_with_logits_loss(logits3, targets3, weights3, tile_b=8))
    ref3 = _reference(logits3, targets3, weights3)
    assert jnp.allclose(out3, ref3, rtol=1e-4, atol=1e-4), (out3, ref3)

    print("KERNEL_OK")
</pallas_src>

<mosaic_0001>
module attributes {stable_mosaic.version = 11 : i64} {
  func.func @_wbce_kernel(%arg0: i32, %arg1: memref<8x128xf32, #tpu.memory_space<vmem>>, %arg2: memref<8x128xf32, #tpu.memory_space<vmem>>, %arg3: memref<8x128xf32, #tpu.memory_space<vmem>>) attributes {dimension_semantics = [#tpu.dimension_semantics<parallel>], iteration_bounds = array<i64: 1>, scalar_prefetch = 0 : i64, scratch_operands = 0 : i64, tpu.core_type = #tpu.core_type<tc>, window_params = [{transform_indices = @transform_0, window_bounds = array<i64: 8, 128>}, {transform_indices = @transform_1, window_bounds = array<i64: 8, 128>}, {transform_indices = @transform_2, window_bounds = array<i64: 8, 128>}]} {
    %c0 = arith.constant 0 : index
    %c0_0 = arith.constant 0 : index
    %0 = vector.load %arg1[%c0, %c0_0] : memref<8x128xf32, #tpu.memory_space<vmem>>, vector<8x128xf32>
    %c0_1 = arith.constant 0 : index
    %c0_2 = arith.constant 0 : index
    %1 = vector.load %arg2[%c0_1, %c0_2] : memref<8x128xf32, #tpu.memory_space<vmem>>, vector<8x128xf32>
    %cst = arith.constant 0.000000e+00 : f32
    %2 = vector.broadcast %cst : f32 to vector<8x128xf32>
    %3 = arith.maximumf %0, %2 : vector<8x128xf32>
    %4 = arith.mulf %0, %1 : vector<8x128xf32>
    %5 = arith.subf %3, %4 : vector<8x128xf32>
    %6 = math.absf %0 : vector<8x128xf32>
    %cst_3 = arith.constant 0.000000e+00 : f32
    %7 = vector.broadcast %cst_3 : f32 to vector<8x128xf32>
    %8 = arith.subf %7, %6 : vector<8x128xf32>
    %9 = math.exp %8 : vector<8x128xf32>
    %10 = math.log1p %9 : vector<8x128xf32>
    %11 = arith.addf %5, %10 : vector<8x128xf32>
    %12 = vector.shape_cast %11 : vector<8x128xf32> to vector<1x8x128xf32>
    %cst_4 = arith.constant dense<0.000000e+00> : vector<8x128xf32>
    %13 = vector.multi_reduction <add>, %12, %cst_4 [0] : vector<1x8x128xf32> to vector<8x128xf32>
    %c0_5 = arith.constant 0 : index
    %c0_6 = arith.constant 0 : index
    %14 = vector.load %arg3[%c0_5, %c0_6] : memref<8x128xf32, #tpu.memory_space<vmem>>, vector<8x128xf32>
    tpu.vector_store %arg3[%c0_5, %c0_6], %13 {strides = array<i32>} : memref<8x128xf32, #tpu.memory_space<vmem>>, vector<8x128xf32>,
    return
  }
  func.func @transform_0(%arg0: i32) -> (i32, i32) {
    %c0_i32 = arith.constant 0 : i32
    %c0_i32_0 = arith.constant 0 : i32
    return %arg0, %c0_i32 : i32, i32
  }
  func.func @transform_1(%arg0: i32) -> (i32, i32) {
    %c0_i32 = arith.constant 0 : i32
    %c0_i32_0 = arith.constant 0 : i32
    return %arg0, %c0_i32 : i32, i32
  }
  func.func @transform_2(%arg0: i32) -> (i32, i32) {
    %c0_i32 = arith.constant 0 : i32
    %c0_i32_0 = arith.constant 0 : i32
    return %arg0, %c0_i32 : i32, i32
  }
}

</mosaic_0001>

<llo_original>
// kernel: tpu_custom_call.1
$region0: #{tpu_custom_call.1}
  #allocation0 [shape = 'u32[]', space=smem, size = 0x4, offset = 0x4, fixed_abs, tag = 'smem constant byte address 0x4 - core index']
  #allocation1 [shape = 'u32[144,128]{1,0:T(1,128)}', space=vmem, size = 0x12000, scoped, tag = 'internal scratch']
  %s0 = inlined_call_operand.hbm [shape: f32[8,128], index: 0, kind: input, shape index: {}]
  %s1 = inlined_call_operand.hbm [shape: f32[8,128], index: 1, kind: input, shape index: {}]
  %s2 = inlined_call_operand.hbm [shape: f32[8,128], index: 2, kind: output, shape index: {}]
  %s3 = sld [smem:[#allocation0]]
  $region26: #{tpu_custom_call.1} parent=0
    _
  %s5 = ssub.s32 1, %s3
  %s6 = scalar_select 0, %s5, %s3
  $region1: #{tpu_custom_call.1} parent=0
    #allocation2 [shape = 'u8[4096]{0}', space=vmem, size = 0x1000, scoped, tag = 'input window, operand 0, single buffered']
    #allocation3 [shape = 's32[1]{0}', space=sflag, size = 0x4, scoped, tag = 'scoped memory for tpu_custom_call.1']
    #allocation4 [shape = 's32[1]{0}', space=sflag, size = 0x4, scoped, tag = 'scoped memory for tpu_custom_call.1']
    #allocation5 [shape = 'u8[4096]{0}', space=vmem, size = 0x1000, scoped, tag = 'input window, operand 1, single buffered']
    #allocation6 [shape = 's32[1]{0}', space=sflag, size = 0x4, scoped, tag = 'scoped memory for tpu_custom_call.1']
    #allocation7 [shape = 'u8[4096]{0}', space=vmem, size = 0x1000, scoped, tag = 'output window, operand 0, single buffered']
    %7 = vsyncpa [#allocation3], 0
    %8 = vsyncpa [#allocation6], 0
    %9 = vsyncpa [#allocation4], 0
    // Predicated region
    $region2: #{tpu_custom_call.1} parent=1 // pred_check
      _
    $region3: #{tpu_custom_call.1} parent=1 // pred_check_branch
      %11 = sbr.rel (0) target = $region5
    $region4: #{tpu_custom_call.1} parent=1 // pred_region
      %s13 = ssub.s32 128, 128
      %14 = vsyncadd [#allocation3], %s13
      %s16 = sshll.u32 [#allocation2], 4
      %s17 = int_to_ptr.vmem [resolvable:$true] %s16
      %19 = dma.hbm_to_vmem [thread:$0]  %s0, 128, %s17, [#allocation3]
    $region5: #{tpu_custom_call.1} parent=1 // pred_fallthru
      _
    // Predicated region
    $region6: #{tpu_custom_call.1} parent=1 // pred_check
      _
    $region7: #{tpu_custom_call.1} parent=1 // pred_check_branch
      %21 = sbr.rel (0) target = $region9
    $region8: #{tpu_custom_call.1} parent=1 // pred_region
      %s23 = ssub.s32 128, 128
      %24 = vsyncadd [#allocation6], %s23
      %s26 = sshll.u32 [#allocation5], 4
      %s27 = int_to_ptr.vmem [resolvable:$true] %s26
      %29 = dma.hbm_to_vmem [thread:$0]  %s1, 128, %s27, [#allocation6]
    $region9: #{tpu_custom_call.1} parent=1 // pred_fallthru
      _
    // Predicated region
    $region10: #{tpu_custom_call.1} parent=1 // pred_check
      _
    $region11: #{tpu_custom_call.1} parent=1 // pred_check_branch
      %31 = sbr.rel (0) target = $region13
    $region12: #{tpu_custom_call.1} parent=1 // pred_region
      %32 = dma.done [#allocation3], 128
    $region13: #{tpu_custom_call.1} parent=1 // pred_fallthru
      _
    // Predicated region
    $region14: #{tpu_custom_call.1} parent=1 // pred_check
      _
    $region15: #{tpu_custom_call.1} parent=1 // pred_check_branch
      %34 = sbr.rel (0) target = $region17
    $region16: #{tpu_custom_call.1} parent=1 // pred_region
      %35 = dma.done [#allocation6], 128
    $region17: #{tpu_custom_call.1} parent=1 // pred_fallthru
      _
    %v36 = vld [vmem:[#allocation2] sm:$0xff]
    %v37 = vld [vmem:[#allocation5] sm:$0xff]
    %v38 = vmax.f32 %v36, 0.0
    %v39 = vmul.f32 %v36, %v37
    %v40 = vsub.f32 %v38, %v39
    %v41 = vand.u32 2147483647, %v36
    %v42 = vsub.f32 0.0, %v41
    %v43 = vmul.f32 %v42, 1.442695
    %v44 = vpow.pop %v43
    %v45 = vadd.f32 %v44, 1.0
    %v46 = vlog2.pop %v45
    %v47 = vmul.f32 %v46, 0.6931472
    %v48 = vmul.f32 -0.5, %v44
    %v49 = vadd.f32 %v48, 1.0
    %v50 = vmul.f32 %v49, %v44
    %v51 = vand.u32 2147483647, %v44
    %vm52 = vcmp.lt.f32.partialorder %v51, 0.0004427343
    %v53 = vsel %vm52, %v50, %v47
    %v54 = vadd.f32 %v40, %v53
    %v55 = vadd.f32 %v54, 0.0
    %56 = vst [vmem:[#allocation7] sm:$0xff] %v55
    // Predicated region
    $region18: #{tpu_custom_call.1} parent=1 // pred_check
      _
    $region19: #{tpu_custom_call.1} parent=1 // pred_check_branch
      %58 = sbr.rel (0) target = $region21
    $region20: #{tpu_custom_call.1} parent=1 // pred_region
      %s60 = ssub.s32 128, 128
      %61 = vsyncadd [#allocation4], %s60
      %s63 = sshll.u32 [#allocation7], 4
      %s64 = int_to_ptr.vmem [resolvable:$true] %s63
      %66 = dma.vmem_to_hbm [thread:$0]  %s64, 128, %s2, [#allocation4]
    $region21: #{tpu_custom_call.1} parent=1 // pred_fallthru
      _
    // Predicated region
    $region22: #{tpu_custom_call.1} parent=1 // pred_check
      _
    $region23: #{tpu_custom_call.1} parent=1 // pred_check_branch
      %68 = sbr.rel (0) target = $region25
    $region24: #{tpu_custom_call.1} parent=1 // pred_region
      %69 = dma.done [#allocation4], 128
    $region25: #{tpu_custom_call.1} parent=1 // pred_fallthru
      _
    %70 = vsyncpa [#allocation3], 1
    %71 = vsyncpa [#allocation6], 1
    %72 = vsyncpa [#allocation4], 1

</llo_original>
